<compile_context>
chip_gen: v6e
topology: v6e:2x2x1
jax: 0.10.0
libtpu: 0.0.40
codegen_flags: <defaults>
</compile_context>

<pallas_src>
import jax
import jax.numpy as jnp
from jax.experimental import pallas as pl
from jax.experimental.pallas import tpu as pltpu

_LANES = 128


def _ffn_kernel(x_ref, w1_ref, b1_ref, w2_ref, scale_ref, shift_ref, o_ref):
    # linear1 + relu (dropout in eval = identity): (TM,E)@(E,H) + (1,H)
    h = jnp.dot(x_ref[...], w1_ref[...], preferred_element_type=jnp.float32) + b1_ref[...]
    h = jnp.maximum(h, 0.0)
    # linear2 into lane-padded output width: (TM,H)@(H,Opad)
    z = jnp.dot(h, w2_ref[...], preferred_element_type=jnp.float32)
    # BN (eval) commuted past linear2: per-row scale, precombined shift (+ bias2)
    o_ref[...] = (scale_ref[...] * z + shift_ref[...]).astype(o_ref.dtype)


def compare_forward_net(data, params, *, eps=1e-5, tm=None):
    """data: (B, 20, E) float32. params: dict of weights (see init_params)."""
    B, C, E = data.shape
    assert C == 20, "BatchNorm1d(20) fixes the phrase/channel dim to 20"
    H = params["w1"].shape[1]
    O = params["w2"].shape[1]
    R = B * C

    # ---- glue (plain JAX, tiny): fold BN running stats + commute past linear2 ----
    bn_scale = params["bn_gamma"] / jnp.sqrt(params["bn_running_var"] + eps)   # (20,)
    bn_shift = params["bn_beta"] - params["bn_running_mean"] * bn_scale        # (20,)

    # Pad the output dim to a multiple of 128 lanes so the kernel's stores are dense.
    Opad = max(_LANES, pl.cdiv(O, _LANES) * _LANES)
    w2p = jnp.zeros((H, Opad), jnp.float32).at[:, :O].set(params["w2"])
    b2p = jnp.zeros((Opad,), jnp.float32).at[:O].set(params["b2"])
    w2_colsum = jnp.sum(w2p, axis=0)                                           # (Opad,)

    # Per-row (channel r % 20) scale / combined shift, lane-dense (R, Opad).
    row_scale = jnp.broadcast_to(jnp.tile(bn_scale, B)[:, None], (R, Opad))
    row_shift = jnp.tile(bn_shift, B)[:, None] * w2_colsum[None, :] + b2p[None, :]

    x2d = data.reshape(R, E).astype(jnp.float32)
    b1 = params["b1"].reshape(1, H).astype(jnp.float32)

    # Row tiling: single grid step for small problems; 512-row tiles otherwise
    # (multiple of 256 for the v6e/v7x MXU, multiple of 128 for v5e).
    if tm is None:
        tm = R if R <= 1024 else 512
    Rpad = pl.cdiv(R, tm) * tm
    if Rpad != R:
        pad = Rpad - R
        x2d = jnp.pad(x2d, ((0, pad), (0, 0)))
        row_scale = jnp.pad(row_scale, ((0, pad), (0, 0)))
        row_shift = jnp.pad(row_shift, ((0, pad), (0, 0)))

    out2d = pl.pallas_call(
        _ffn_kernel,
        out_shape=jax.ShapeDtypeStruct((Rpad, Opad), jnp.float32),
        grid_spec=pltpu.PrefetchScalarGridSpec(
            num_scalar_prefetch=0,
            grid=(Rpad // tm,),
            in_specs=[
                pl.BlockSpec((tm, E), lambda i: (i, 0)),      # x rows
                pl.BlockSpec((E, H), lambda i: (0, 0)),       # W1 (pre-transposed, resident)
                pl.BlockSpec((1, H), lambda i: (0, 0)),       # b1
                pl.BlockSpec((H, Opad), lambda i: (0, 0)),    # W2 (lane-padded, resident)
                pl.BlockSpec((tm, Opad), lambda i: (i, 0)),   # per-row BN scale (lane-dense)
                pl.BlockSpec((tm, Opad), lambda i: (i, 0)),   # per-row shift + b2 (lane-dense)
            ],
            out_specs=pl.BlockSpec((tm, Opad), lambda i: (i, 0)),
        ),
        compiler_params=pltpu.CompilerParams(
            dimension_semantics=("parallel",),
        ),
    )(x2d, params["w1"], b1, w2p, row_scale, row_shift)

    return out2d[:R, :O].reshape(B, C, O)


def init_params(key, compare_emb_size, hidden_size, output_size):
    k1, k2, k3, k4, k5, k6, k7, k8 = jax.random.split(key, 8)
    # Linear weights stored pre-transposed as (in, out): y = x @ W + b.
    s1 = 1.0 / jnp.sqrt(compare_emb_size)
    s2 = 1.0 / jnp.sqrt(hidden_size)
    return {
        "w1": jax.random.uniform(k1, (compare_emb_size, hidden_size), jnp.float32, -s1, s1),
        "b1": jax.random.uniform(k2, (hidden_size,), jnp.float32, -s1, s1),
        "w2": jax.random.uniform(k3, (hidden_size, output_size), jnp.float32, -s2, s2),
        "b2": jax.random.uniform(k4, (output_size,), jnp.float32, -s2, s2),
        # BatchNorm1d(20) parameters / running stats (deterministic, non-trivial).
        "bn_gamma": 1.0 + 0.1 * jax.random.normal(k5, (20,), jnp.float32),
        "bn_beta": 0.1 * jax.random.normal(k6, (20,), jnp.float32),
        "bn_running_mean": 0.1 * jax.random.normal(k7, (20,), jnp.float32),
        "bn_running_var": jax.random.uniform(k8, (20,), jnp.float32, 0.5, 1.5),
    }


if __name__ == "__main__":
    key = jax.random.PRNGKey(0)
    kx, kp = jax.random.split(key)

    B, C = 4, 20
    compare_emb_size, hidden_size, output_size = 32, 32, 16

    data = jax.random.normal(kx, (B, C, compare_emb_size), jnp.float32)
    params = init_params(kp, compare_emb_size, hidden_size, output_size)

    out = compare_forward_net(data, params)
    out = jax.block_until_ready(out)

    # quick sanity check against plain-JAX reference (eval-mode semantics)
    h = jnp.maximum(data @ params["w1"] + params["b1"], 0.0)
    scale = params["bn_gamma"] / jnp.sqrt(params["bn_running_var"] + 1e-5)
    shift = params["bn_beta"] - params["bn_running_mean"] * scale
    h = h * scale[None, :, None] + shift[None, :, None]
    ref = h @ params["w2"] + params["b2"]
    assert out.shape == (B, C, output_size)
    assert jnp.allclose(out, ref, atol=1e-4, rtol=1e-4)

    print("KERNEL_OK")
</pallas_src>

<mosaic_0001>
module attributes {stable_mosaic.version = 11 : i64} {
  func.func @_ffn_kernel(%arg0: i32, %arg1: memref<80x32xf32, #tpu.memory_space<vmem>>, %arg2: memref<32x32xf32, #tpu.memory_space<vmem>>, %arg3: memref<1x32xf32, #tpu.memory_space<vmem>>, %arg4: memref<32x128xf32, #tpu.memory_space<vmem>>, %arg5: memref<80x128xf32, #tpu.memory_space<vmem>>, %arg6: memref<80x128xf32, #tpu.memory_space<vmem>>, %arg7: memref<80x128xf32, #tpu.memory_space<vmem>>) attributes {dimension_semantics = [#tpu.dimension_semantics<parallel>], iteration_bounds = array<i64: 1>, scalar_prefetch = 0 : i64, scratch_operands = 0 : i64, tpu.core_type = #tpu.core_type<tc>, window_params = [{transform_indices = @transform_0, window_bounds = array<i64: 80, 32>}, {pipeline_mode = #tpu.pipeline_mode<synchronous>, transform_indices = @transform_1, window_bounds = array<i64: 32, 32>}, {pipeline_mode = #tpu.pipeline_mode<synchronous>, transform_indices = @transform_2, window_bounds = array<i64: 1, 32>}, {pipeline_mode = #tpu.pipeline_mode<synchronous>, transform_indices = @transform_3, window_bounds = array<i64: 32, 128>}, {transform_indices = @transform_4, window_bounds = array<i64: 80, 128>}, {transform_indices = @transform_5, window_bounds = array<i64: 80, 128>}, {transform_indices = @transform_6, window_bounds = array<i64: 80, 128>}]} {
    %c0 = arith.constant 0 : index
    %c0_0 = arith.constant 0 : index
    %0 = vector.load %arg1[%c0, %c0_0] : memref<80x32xf32, #tpu.memory_space<vmem>>, vector<80x32xf32>
    %c0_1 = arith.constant 0 : index
    %c0_2 = arith.constant 0 : index
    %1 = vector.load %arg2[%c0_1, %c0_2] : memref<32x32xf32, #tpu.memory_space<vmem>>, vector<32x32xf32>
    %cst = arith.constant dense<0.000000e+00> : vector<80x32xf32>
    %2 = tpu.matmul %0, %1, %cst {dimension_numbers = #tpu.dot_dimension_numbers<[1], [0], [0], [1], [0, 0, 1, 1], [], []>} : vector<80x32xf32>, vector<32x32xf32>, vector<80x32xf32> -> vector<80x32xf32>
    %c0_3 = arith.constant 0 : index
    %c0_4 = arith.constant 0 : index
    %3 = vector.load %arg3[%c0_3, %c0_4] : memref<1x32xf32, #tpu.memory_space<vmem>>, vector<1x32xf32>
    %4 = vector.broadcast %3 : vector<1x32xf32> to vector<80x32xf32>
    %5 = arith.addf %2, %4 : vector<80x32xf32>
    %cst_5 = arith.constant 0.000000e+00 : f32
    %6 = vector.broadcast %cst_5 : f32 to vector<80x32xf32>
    %7 = arith.maximumf %5, %6 : vector<80x32xf32>
    %c0_6 = arith.constant 0 : index
    %c0_7 = arith.constant 0 : index
    %8 = vector.load %arg4[%c0_6, %c0_7] : memref<32x128xf32, #tpu.memory_space<vmem>>, vector<32x128xf32>
    %cst_8 = arith.constant dense<0.000000e+00> : vector<80x128xf32>
    %9 = tpu.matmul %7, %8, %cst_8 {dimension_numbers = #tpu.dot_dimension_numbers<[1], [0], [0], [1], [0, 0, 1, 1], [], []>} : vector<80x32xf32>, vector<32x128xf32>, vector<80x128xf32> -> vector<80x128xf32>
    %c0_9 = arith.constant 0 : index
    %c0_10 = arith.constant 0 : index
    %10 = vector.load %arg5[%c0_9, %c0_10] : memref<80x128xf32, #tpu.memory_space<vmem>>, vector<80x128xf32>
    %11 = arith.mulf %10, %9 : vector<80x128xf32>
    %c0_11 = arith.constant 0 : index
    %c0_12 = arith.constant 0 : index
    %12 = vector.load %arg6[%c0_11, %c0_12] : memref<80x128xf32, #tpu.memory_space<vmem>>, vector<80x128xf32>
    %13 = arith.addf %11, %12 : vector<80x128xf32>
    %c0_13 = arith.constant 0 : index
    %c0_14 = arith.constant 0 : index
    %14 = vector.load %arg7[%c0_13, %c0_14] : memref<80x128xf32, #tpu.memory_space<vmem>>, vector<80x128xf32>
    tpu.vector_store %arg7[%c0_13, %c0_14], %13 {strides = array<i32>} : memref<80x128xf32, #tpu.memory_space<vmem>>, vector<80x128xf32>,
    return
  }
  func.func @transform_0(%arg0: i32) -> (i32, i32) {
    %c0_i32 = arith.constant 0 : i32
    %c0_i32_0 = arith.constant 0 : i32
    return %arg0, %c0_i32 : i32, i32
  }
  func.func @transform_1(%arg0: i32) -> (i32, i32) {
    %c0_i32 = arith.constant 0 : i32
    %c0_i32_0 = arith.constant 0 : i32
    %c0_i32_1 = arith.constant 0 : i32
    return %c0_i32, %c0_i32_0 : i32, i32
  }
  func.func @transform_2(%arg0: i32) -> (i32, i32) {
    %c0_i32 = arith.constant 0 : i32
    %c0_i32_0 = arith.constant 0 : i32
    %c0_i32_1 = arith.constant 0 : i32
    return %c0_i32, %c0_i32_0 : i32, i32
  }
  func.func @transform_3(%arg0: i32) -> (i32, i32) {
    %c0_i32 = arith.constant 0 : i32
    %c0_i32_0 = arith.constant 0 : i32
    %c0_i32_1 = arith.constant 0 : i32
    return %c0_i32, %c0_i32_0 : i32, i32
  }
  func.func @transform_4(%arg0: i32) -> (i32, i32) {
    %c0_i32 = arith.constant 0 : i32
    %c0_i32_0 = arith.constant 0 : i32
    return %arg0, %c0_i32 : i32, i32
  }
  func.func @transform_5(%arg0: i32) -> (i32, i32) {
    %c0_i32 = arith.constant 0 : i32
    %c0_i32_0 = arith.constant 0 : i32
    return %arg0, %c0_i32 : i32, i32
  }
  func.func @transform_6(%arg0: i32) -> (i32, i32) {
    %c0_i32 = arith.constant 0 : i32
    %c0_i32_0 = arith.constant 0 : i32
    return %arg0, %c0_i32 : i32, i32
  }
}

</mosaic_0001>

<llo_original>
// kernel: tpu_custom_call.1
$region0: #{tpu_custom_call.1}
  #allocation0 [shape = 'u32[]', space=smem, size = 0x4, offset = 0x4, fixed_abs, tag = 'smem constant byte address 0x4 - core index']
  #allocation1 [shape = 'u32[144,128]{1,0:T(1,128)}', space=vmem, size = 0x12000, scoped, tag = 'internal scratch']
  %s0 = inlined_call_operand.vmem [shape: f32[80,32], index: 0, kind: input, shape index: {}]
  %s1 = inlined_call_operand.vmem [shape: f32[32,32], index: 1, kind: input, shape index: {}]
  %s2 = inlined_call_operand.vmem [shape: f32[1,32], index: 2, kind: input, shape index: {}]
  %s3 = inlined_call_operand.hbm [shape: f32[32,128], index: 3, kind: input, shape index: {}]
  %s4 = inlined_call_operand.vmem [shape: f32[80,128], index: 4, kind: input, shape index: {}]
  %s5 = inlined_call_operand.hbm [shape: f32[80,128], index: 5, kind: input, shape index: {}]
  %s6 = inlined_call_operand.hbm [shape: f32[80,128], index: 6, kind: output, shape index: {}]
  %s7 = sld [smem:[#allocation0]]
  $region42: #{tpu_custom_call.1} parent=0
    _
  %s9 = ssub.s32 1, %s7
  %s10 = scalar_select 0, %s9, %s7
  $region1: #{tpu_custom_call.1} parent=0
    #allocation2 [shape = 'u8[16384]{0}', space=vmem, size = 0x4000, scoped, tag = 'input window, operand 3, single buffered']
    #allocation3 [shape = 's32[1]{0}', space=sflag, size = 0x4, scoped, tag = 'scoped memory for tpu_custom_call.1']
    #allocation4 [shape = 's32[1]{0}', space=sflag, size = 0x4, scoped, tag = 'scoped memory for tpu_custom_call.1']
    #allocation5 [shape = 'u8[40960]{0}', space=vmem, size = 0xa000, scoped, tag = 'input window, operand 5, single buffered']
    #allocation6 [shape = 's32[1]{0}', space=sflag, size = 0x4, scoped, tag = 'scoped memory for tpu_custom_call.1']
    #allocation7 [shape = 'u8[40960]{0}', space=vmem, size = 0xa000, scoped, tag = 'output window, operand 0, single buffered']
    %11 = vsyncpa [#allocation3], 0
    %12 = vsyncpa [#allocation6], 0
    %13 = vsyncpa [#allocation4], 0
    // Predicated region
    $region2: #{tpu_custom_call.1} parent=1 // pred_check
      _
    $region3: #{tpu_custom_call.1} parent=1 // pred_check_branch
      %15 = sbr.rel (0) target = $region5
    $region4: #{tpu_custom_call.1} parent=1 // pred_region
      _
    $region5: #{tpu_custom_call.1} parent=1 // pred_fallthru
      _
    // Predicated region
    $region6: #{tpu_custom_call.1} parent=1 // pred_check
      _
    $region7: #{tpu_custom_call.1} parent=1 // pred_check_branch
      %17 = sbr.rel (0) target = $region9
    $region8: #{tpu_custom_call.1} parent=1 // pred_region
      _
    $region9: #{tpu_custom_call.1} parent=1 // pred_fallthru
      _
    // Predicated region
    $region10: #{tpu_custom_call.1} parent=1 // pred_check
      _
    $region11: #{tpu_custom_call.1} parent=1 // pred_check_branch
      %19 = sbr.rel (0) target = $region13
    $region12: #{tpu_custom_call.1} parent=1 // pred_region
      _
    $region13: #{tpu_custom_call.1} parent=1 // pred_fallthru
      _
    // Predicated region
    $region14: #{tpu_custom_call.1} parent=1 // pred_check
      _
    $region15: #{tpu_custom_call.1} parent=1 // pred_check_branch
      %21 = sbr.rel (0) target = $region17
    $region16: #{tpu_custom_call.1} parent=1 // pred_region
      %s23 = ssub.s32 512, 512
      %24 = vsyncadd [#allocation3], %s23
      %s25 = sshll.u32 [#allocation2], 4
      %s26 = int_to_ptr.vmem [resolvable:$true] %s25
      %31 = dma.hbm_to_vmem [thread:$0]  %s3, 512, %s26, [#allocation3], 128, 128, 8
    $region17: #{tpu_custom_call.1} parent=1 // pred_fallthru
      _
    // Predicated region
    $region18: #{tpu_custom_call.1} parent=1 // pred_check
      _
    $region19: #{tpu_custom_call.1} parent=1 // pred_check_branch
      %33 = sbr.rel (0) target = $region21
    $region20: #{tpu_custom_call.1} parent=1 // pred_region
      _
    $region21: #{tpu_custom_call.1} parent=1 // pred_fallthru
      _
    // Predicated region
    $region22: #{tpu_custom_call.1} parent=1 // pred_check
      _
    $region23: #{tpu_custom_call.1} parent=1 // pred_check_branch
      %35 = sbr.rel (0) target = $region25
    $region24: #{tpu_custom_call.1} parent=1 // pred_region
      %s37 = ssub.s32 1280, 1280
      %38 = vsyncadd [#allocation6], %s37
      %s39 = sshll.u32 [#allocation5], 4
      %s40 = int_to_ptr.vmem [resolvable:$true] %s39
      %45 = dma.hbm_to_vmem [thread:$0]  %s5, 1280, %s40, [#allocation6], 128, 128, 8
    $region25: #{tpu_custom_call.1} parent=1 // pred_fallthru
      _
    // Predicated region
    $region26: #{tpu_custom_call.1} parent=1 // pred_check
      _
    $region27: #{tpu_custom_call.1} parent=1 // pred_check_branch
      %47 = sbr.rel (0) target = $region29
    $region28: #{tpu_custom_call.1} parent=1 // pred_region
      %48 = dma.done [#allocation3], 512
    $region29: #{tpu_custom_call.1} parent=1 // pred_fallthru
      _
    // Predicated region
    $region30: #{tpu_custom_call.1} parent=1 // pred_check
      _
    $region31: #{tpu_custom_call.1} parent=1 // pred_check_branch
      %50 = sbr.rel (0) target = $region33
    $region32: #{tpu_custom_call.1} parent=1 // pred_region
      %51 = dma.done [#allocation6], 1280
    $region33: #{tpu_custom_call.1} parent=1 // pred_fallthru
      _
    %v52 = vld [vmem:[%s0] sm:$0xff]
    %v53 = vld [vmem:[%s0 + $0x8] sm:$0xff]
    %v54 = vld [vmem:[%s0 + $0x10] sm:$0xff]
    %v55 = vld [vmem:[%s0 + $0x18] sm:$0xff]
    %v56 = vld [vmem:[%s0 + $0x20] sm:$0xff]
    %v57 = vld [vmem:[%s0 + $0x28] sm:$0xff]
    %v58 = vld [vmem:[%s0 + $0x30] sm:$0xff]
    %v59 = vld [vmem:[%s0 + $0x38] sm:$0xff]
    %v60 = vld [vmem:[%s0 + $0x40] sm:$0xff]
    %v61 = vld [vmem:[%s0 + $0x48] sm:$0xff]
    %v62 = vld [vmem:[%s1] sm:$0xff]
    %v63 = vld [vmem:[%s1 + $0x8] sm:$0xff]
    %v64 = vld [vmem:[%s1 + $0x10] sm:$0xff]
    %v65 = vld [vmem:[%s1 + $0x18] sm:$0xff]
    %v66 = vld [vmem:[%s2] sm:$0x1]
    %v68 = vlaneseq
    %v69 = vshrl.u32 %v68, 7
    %v70 = vsub.s32 0, %v69
    %v71 = vrot.slane %v66, %v70
    %vm73 = vcmask 261120
    %v75 = vsel %vm73, %v52, 0
    %v78 = vsel %vm73, %v53, 0
    %v81 = vsel %vm73, %v54, 0
    %v84 = vsel %vm73, %v55, 0
    %v87 = vsel %vm73, %v56, 0
    %v90 = vsel %vm73, %v57, 0
    %v93 = vsel %vm73, %v58, 0
    %v96 = vsel %vm73, %v59, 0
    %v99 = vsel %vm73, %v60, 0
    %v102 = vsel %vm73, %v61, 0
    %104 = vmatprep.subr.mxu0 0.0
    %105 = vmatpush1.msra.mxu0 0.0
    %106 = vmatprep.subr.mxu0 0.0
    %107 = vmatpush1.msra.mxu0 0.0
    %108 = vmatprep.subr.mxu0 0.0
    %109 = vmatpush1.msra.mxu0 0.0
    %110 = vmatprep.subr.mxu0 0.0
    %111 = vmatpush1.msra.mxu0 0.0
    %112 = vmatprep.subr.mxu0 0.0
    %113 = vmatpush1.msra.mxu0 0.0
    %114 = vmatprep.subr.mxu0 0.0
    %115 = vmatpush1.msra.mxu0 0.0
    %116 = vmatprep.subr.mxu0 0.0
    %117 = vmatpush1.msra.mxu0 0.0
    %118 = vmatprep.subr.mxu0 0.0
    %119 = vmatpush1.msra.mxu0 0.0
    %120 = vmatprep.subr.mxu0 0.0
    %121 = vmatpush1.msra.mxu0 0.0
    %122 = vmatprep.subr.mxu0 0.0
    %123 = vmatpush1.msra.mxu0 0.0
    %124 = vmatprep.subr.mxu0 0.0
    %125 = vmatpush1.msra.mxu0 0.0
    %126 = vmatprep.subr.mxu0 0.0
    %127 = vmatpush1.msra.mxu0 0.0
    %128 = vmatprep.subr.mxu0 0.0
    %129 = vmatpush1.msra.mxu0 %v65
    %130 = vmatprep.subr.mxu0 0.0
    %131 = vmatpush1.msra.mxu0 %v64
    %132 = vmatprep.subr.mxu0 0.0
    %133 = vmatpush1.msra.mxu0 %v63
    %134 = vmatprep.subr.mxu0 0.0
    %135 = vmatpush1.msra.mxu0 %v62
    %136 = vmatprep.subr.mxu0 0.0
    %137 = vmatpush2.msra.mxu0 0.0
    %138 = vmatprep.subr.mxu0 0.0
    %139 = vmatpush2.msra.mxu0 0.0
    %140 = vmatprep.subr.mxu0 0.0
    %141 = vmatpush2.msra.mxu0 0.0
    %142 = vmatprep.subr.mxu0 0.0
    %143 = vmatpush2.msra.mxu0 0.0
    %144 = vmatprep.subr.mxu0 0.0
    %145 = vmatpush2.msra.mxu0 0.0
    %146 = vmatprep.subr.mxu0 0.0
    %147 = vmatpush2.msra.mxu0 0.0
    %148 = vmatprep.subr.mxu0 0.0
    %149 = vmatpush2.msra.mxu0 0.0
    %150 = vmatprep.subr.mxu0 0.0
    %151 = vmatpush2.msra.mxu0 0.0
    %152 = vmatprep.subr.mxu0 0.0
    %153 = vmatpush2.msra.mxu0 0.0
    %154 = vmatprep.subr.mxu0 0.0
    %155 = vmatpush2.msra.mxu0 0.0
    %156 = vmatprep.subr.mxu0 0.0
    %157 = vmatpush2.msra.mxu0 0.0
    %158 = vmatprep.subr.mxu0 0.0
    %159 = vmatpush2.msra.mxu0 0.0
    %160 = vmatprep.subr.mxu0 0.0
    %161 = vmatpush2.msra.mxu0 0.0
    %162 = vmatprep.subr.mxu0 0.0
    %163 = vmatpush2.msra.mxu0 0.0
    %164 = vmatprep.subr.mxu0 0.0
    %165 = vmatpush2.msra.mxu0 0.0
    %166 = vmatprep.subr.mxu0 0.0
    %167 = vmatpush2.msra.mxu0 0.0
    %168 = vmatprep.mubr.f32.mxu0 0.0
    %169 = vmatmul.mubr.f32.gmra.mxu0 %v75
    %v170 = vpop.f32.mrf.mxu0
    %v171 = vadd.f32 %v71, %v170
    %v172 = vpop.f32.mrf.mxu0
    %173 = vmatprep.mubr.f32.mxu0 0.0
    %174 = vmatmul.mubr.f32.gmra.mxu0 %v78
    %v175 = vpop.f32.mrf.mxu0
    %v176 = vadd.f32 %v71, %v175
    %v177 = vpop.f32.mrf.mxu0
    %178 = vmatprep.mubr.f32.mxu0 0.0
    %179 = vmatmul.mubr.f32.gmra.mxu0 %v81
    %v180 = vpop.f32.mrf.mxu0
    %v181 = vadd.f32 %v71, %v180
    %v182 = vpop.f32.mrf.mxu0
    %183 = vmatprep.mubr.f32.mxu0 0.0
    %184 = vmatmul.mubr.f32.gmra.mxu0 %v84
    %v185 = vpop.f32.mrf.mxu0
    %v186 = vadd.f32 %v71, %v185
    %v187 = vpop.f32.mrf.mxu0
    %188 = vmatprep.mubr.f32.mxu0 0.0
    %189 = vmatmul.mubr.f32.gmra.mxu0 %v87
    %v190 = vpop.f32.mrf.mxu0
    %v191 = vadd.f32 %v71, %v190
    %v192 = vpop.f32.mrf.mxu0
    %193 = vmatprep.mubr.f32.mxu0 0.0
    %194 = vmatmul.mubr.f32.gmra.mxu0 %v90
    %v195 = vpop.f32.mrf.mxu0
    %v196 = vadd.f32 %v71, %v195
    %v197 = vpop.f32.mrf.mxu0
    %198 = vmatprep.mubr.f32.mxu0 0.0
    %199 = vmatmul.mubr.f32.gmra.mxu0 %v93
    %v200 = vpop.f32.mrf.mxu0
    %v201 = vadd.f32 %v71, %v200
    %v202 = vpop.f32.mrf.mxu0
    %203 = vmatprep.mubr.f32.mxu0 0.0
    %204 = vmatmul.mubr.f32.gmra.mxu0 %v96
    %v205 = vpop.f32.mrf.mxu0
    %v206 = vadd.f32 %v71, %v205
    %v207 = vpop.f32.mrf.mxu0
    %208 = vmatprep.mubr.f32.mxu0 0.0
    %209 = vmatmul.mubr.f32.gmra.mxu0 %v99
    %v210 = vpop.f32.mrf.mxu0
    %v211 = vadd.f32 %v71, %v210
    %v212 = vpop.f32.mrf.mxu0
    %213 = vmatprep.mubr.f32.mxu0 0.0
    %214 = vmatmul.mubr.f32.gmra.mxu0 %v102
    %v215 = vpop.f32.mrf.mxu0
    %v216 = vadd.f32 %v71, %v215
    %v217 = vpop.f32.mrf.mxu0
    %218 = vdwg.mxu0
    %v219 = vmax.f32 %v171, 0.0
    %v220 = vmax.f32 %v176, 0.0
    %v221 = vmax.f32 %v181, 0.0
    %v222 = vmax.f32 %v186, 0.0
    %v223 = vmax.f32 %v191, 0.0
    %v224 = vmax.f32 %v196, 0.0
    %v225 = vmax.f32 %v201, 0.0
    %v226 = vmax.f32 %v206, 0.0
    %v227 = vmax.f32 %v211, 0.0
    %v228 = vmax.f32 %v216, 0.0
    %v229 = vld [vmem:[#allocation2] sm:$0xff]
    %v230 = vld [vmem:[#allocation2 + $0x8] sm:$0xff]
    %v231 = vld [vmem:[#allocation2 + $0x10] sm:$0xff]
    %v232 = vld [vmem:[#allocation2 + $0x18] sm:$0xff]
    %v234 = vsel %vm73, %v219, 0
    %v237 = vsel %vm73, %v220, 0
    %v240 = vsel %vm73, %v221, 0
    %v243 = vsel %vm73, %v222, 0
    %v246 = vsel %vm73, %v223, 0
    %v249 = vsel %vm73, %v224, 0
    %v252 = vsel %vm73, %v225, 0
    %v255 = vsel %vm73, %v226, 0
    %v258 = vsel %vm73, %v227, 0
    %v261 = vsel %vm73, %v228, 0
    %263 = vmatprep.subr.mxu0 0.0
    %264 = vmatpush1.msra.mxu0 0.0
    %265 = vmatprep.subr.mxu0 0.0
    %266 = vmatpush1.msra.mxu0 0.0
    %267 = vmatprep.subr.mxu0 0.0
    %268 = vmatpush1.msra.mxu0 0.0
    %269 = vmatprep.subr.mxu0 0.0
    %270 = vmatpush1.msra.mxu0 0.0
    %271 = vmatprep.subr.mxu0 0.0
    %272 = vmatpush1.msra.mxu0 0.0
    %273 = vmatprep.subr.mxu0 0.0
    %274 = vmatpush1.msra.mxu0 0.0
    %275 = vmatprep.subr.mxu0 0.0
    %276 = vmatpush1.msra.mxu0 0.0
    %277 = vmatprep.subr.mxu0 0.0
    %278 = vmatpush1.msra.mxu0 0.0
    %279 = vmatprep.subr.mxu0 0.0
    %280 = vmatpush1.msra.mxu0 0.0
    %281 = vmatprep.subr.mxu0 0.0
    %282 = vmatpush1.msra.mxu0 0.0
    %283 = vmatprep.subr.mxu0 0.0
    %284 = vmatpush1.msra.mxu0 0.0
    %285 = vmatprep.subr.mxu0 0.0
    %286 = vmatpush1.msra.mxu0 0.0
    %287 = vmatprep.subr.mxu0 0.0
    %288 = vmatpush1.msra.mxu0 %v232
    %289 = vmatprep.subr.mxu0 0.0
    %290 = vmatpush1.msra.mxu0 %v231
    %291 = vmatprep.subr.mxu0 0.0
    %292 = vmatpush1.msra.mxu0 %v230
    %293 = vmatprep.subr.mxu0 0.0
    %294 = vmatpush1.msra.mxu0 %v229
    %295 = vmatprep.subr.mxu0 0.0
    %296 = vmatpush2.msra.mxu0 0.0
    %297 = vmatprep.subr.mxu0 0.0
    %298 = vmatpush2.msra.mxu0 0.0
    %299 = vmatprep.subr.mxu0 0.0
    %300 = vmatpush2.msra.mxu0 0.0
    %301 = vmatprep.subr.mxu0 0.0
    %302 = vmatpush2.msra.mxu0 0.0
    %303 = vmatprep.subr.mxu0 0.0
    %304 = vmatpush2.msra.mxu0 0.0
    %305 = vmatprep.subr.mxu0 0.0
    %306 = vmatpush2.msra.mxu0 0.0
    %307 = vmatprep.subr.mxu0 0.0
    %308 = vmatpush2.msra.mxu0 0.0
    %309 = vmatprep.subr.mxu0 0.0
    %310 = vmatpush2.msra.mxu0 0.0
    %311 = vmatprep.subr.mxu0 0.0
    %312 = vmatpush2.msra.mxu0 0.0
    %313 = vmatprep.subr.mxu0 0.0
    %314 = vmatpush2.msra.mxu0 0.0
    %315 = vmatprep.subr.mxu0 0.0
    %316 = vmatpush2.msra.mxu0 0.0
    %317 = vmatprep.subr.mxu0 0.0
    %318 = vmatpush2.msra.mxu0 0.0
    %319 = vmatprep.subr.mxu0 0.0
    %320 = vmatpush2.msra.mxu0 0.0
    %321 = vmatprep.subr.mxu0 0.0
    %322 = vmatpush2.msra.mxu0 0.0
    %323 = vmatprep.subr.mxu0 0.0
    %324 = vmatpush2.msra.mxu0 0.0
    %325 = vmatprep.subr.mxu0 0.0
    %326 = vmatpush2.msra.mxu0 0.0
    %327 = vmatprep.mubr.f32.mxu0 0.0
    %328 = vmatmul.mubr.f32.gmra.mxu0 %v234
    %v329 = vpop.f32.mrf.mxu0
    %v330 = vadd.f32 0.0, %v329
    %v331 = vpop.f32.mrf.mxu0
    %332 = vmatprep.mubr.f32.mxu0 0.0
    %333 = vmatmul.mubr.f32.gmra.mxu0 %v237
    %v334 = vpop.f32.mrf.mxu0
    %v335 = vadd.f32 0.0, %v334
    %v336 = vpop.f32.mrf.mxu0
    %337 = vmatprep.mubr.f32.mxu0 0.0
    %338 = vmatmul.mubr.f32.gmra.mxu0 %v240
    %v339 = vpop.f32.mrf.mxu0
    %v340 = vadd.f32 0.0, %v339
    %v341 = vpop.f32.mrf.mxu0
    %342 = vmatprep.mubr.f32.mxu0 0.0
    %343 = vmatmul.mubr.f32.gmra.mxu0 %v243
    %v344 = vpop.f32.mrf.mxu0
    %v345 = vadd.f32 0.0, %v344
    %v346 = vpop.f32.mrf.mxu0
    %347 = vmatprep.mubr.f32.mxu0 0.0
    %348 = vmatmul.mubr.f32.gmra.mxu0 %v246
    %v349 = vpop.f32.mrf.mxu0
    %v350 = vadd.f32 0.0, %v349
    %v351 = vpop.f32.mrf.mxu0
    %352 = vmatprep.mubr.f32.mxu0 0.0
    %353 = vmatmul.mubr.f32.gmra.mxu0 %v249
    %v354 = vpop.f32.mrf.mxu0
    %v355 = vadd.f32 0.0, %v354
    %v356 = vpop.f32.mrf.mxu0
    %357 = vmatprep.mubr.f32.mxu0 0.0
    %358 = vmatmul.mubr.f32.gmra.mxu0 %v252
    %v359 = vpop.f32.mrf.mxu0
    %v360 = vadd.f32 0.0, %v359
    %v361 = vpop.f32.mrf.mxu0
    %362 = vmatprep.mubr.f32.mxu0 0.0
    %363 = vmatmul.mubr.f32.gmra.mxu0 %v255
    %v364 = vpop.f32.mrf.mxu0
    %v365 = vadd.f32 0.0, %v364
    %v366 = vpop.f32.mrf.mxu0
    %367 = vmatprep.mubr.f32.mxu0 0.0
    %368 = vmatmul.mubr.f32.gmra.mxu0 %v258
    %v369 = vpop.f32.mrf.mxu0
    %v370 = vadd.f32 0.0, %v369
    %v371 = vpop.f32.mrf.mxu0
    %372 = vmatprep.mubr.f32.mxu0 0.0
    %373 = vmatmul.mubr.f32.gmra.mxu0 %v261
    %v374 = vpop.f32.mrf.mxu0
    %v375 = vadd.f32 0.0, %v374
    %v376 = vpop.f32.mrf.mxu0
    %377 = vdwg.mxu0
    %v378 = vld [vmem:[%s4] sm:$0xff]
    %v379 = vld [vmem:[%s4 + $0x8] sm:$0xff]
    %v380 = vld [vmem:[%s4 + $0x10] sm:$0xff]
    %v381 = vld [vmem:[%s4 + $0x18] sm:$0xff]
    %v382 = vld [vmem:[%s4 + $0x20] sm:$0xff]
    %v383 = vld [vmem:[%s4 + $0x28] sm:$0xff]
    %v384 = vld [vmem:[%s4 + $0x30] sm:$0xff]
    %v385 = vld [vmem:[%s4 + $0x38] sm:$0xff]
    %v386 = vld [vmem:[%s4 + $0x40] sm:$0xff]
    %v387 = vld [vmem:[%s4 + $0x48] sm:$0xff]
    %v388 = vmul.f32 %v378, %v330
    %v389 = vmul.f32 %v379, %v335
    %v390 = vmul.f32 %v380, %v340
    %v391 = vmul.f32 %v381, %v345
    %v392 = vmul.f32 %v382, %v350
    %v393 = vmul.f32 %v383, %v355
    %v394 = vmul.f32 %v384, %v360
    %v395 = vmul.f32 %v385, %v365
    %v396 = vmul.f32 %v386, %v370
    %v397 = vmul.f32 %v387, %v375
    %v398 = vld [vmem:[#allocation5] sm:$0xff]
    %v399 = vld [vmem:[#allocation5 + $0x8] sm:$0xff]
    %v400 = vld [vmem:[#allocation5 + $0x10] sm:$0xff]
    %v401 = vld [vmem:[#allocation5 + $0x18] sm:$0xff]
    %v402 = vld [vmem:[#allocation5 + $0x20] sm:$0xff]
    %v403 = vld [vmem:[#allocation5 + $0x28] sm:$0xff]
    %v404 = vld [vmem:[#allocation5 + $0x30] sm:$0xff]
    %v405 = vld [vmem:[#allocation5 + $0x38] sm:$0xff]
    %v406 = vld [vmem:[#allocation5 + $0x40] sm:$0xff]
    %v407 = vld [vmem:[#allocation5 + $0x48] sm:$0xff]
    %v408 = vadd.f32 %v388, %v398
    %v409 = vadd.f32 %v389, %v399
    %v410 = vadd.f32 %v390, %v400
    %v411 = vadd.f32 %v391, %v401
    %v412 = vadd.f32 %v392, %v402
    %v413 = vadd.f32 %v393, %v403
    %v414 = vadd.f32 %v394, %v404
    %v415 = vadd.f32 %v395, %v405
    %v416 = vadd.f32 %v396, %v406
    %v417 = vadd.f32 %v397, %v407
    %418 = vst [vmem:[#allocation7] sm:$0xff] %v408
    %419 = vst [vmem:[#allocation7 + $0x8] sm:$0xff] %v409
    %420 = vst [vmem:[#allocation7 + $0x10] sm:$0xff] %v410
    %421 = vst [vmem:[#allocation7 + $0x18] sm:$0xff] %v411
    %422 = vst [vmem:[#allocation7 + $0x20] sm:$0xff] %v412
    %423 = vst [vmem:[#allocation7 + $0x28] sm:$0xff] %v413
    %424 = vst [vmem:[#allocation7 + $0x30] sm:$0xff] %v414
    %425 = vst [vmem:[#allocation7 + $0x38] sm:$0xff] %v415
    %426 = vst [vmem:[#allocation7 + $0x40] sm:$0xff] %v416
    %427 = vst [vmem:[#allocation7 + $0x48] sm:$0xff] %v417
    // Predicated region
    $region34: #{tpu_custom_call.1} parent=1 // pred_check
      _
    $region35: #{tpu_custom_call.1} parent=1 // pred_check_branch
      %429 = sbr.rel (0) target = $region37
    $region36: #{tpu_custom_call.1} parent=1 // pred_region
      %s431 = ssub.s32 1280, 1280
      %432 = vsyncadd [#allocation4], %s431
      %s433 = sshll.u32 [#allocation7], 4
      %s434 = int_to_ptr.vmem [resolvable:$true] %s433
      %439 = dma.vmem_to_hbm [thread:$0]  %s434, 1280, %s6, [#allocation4], 128, 128, 8
    $region37: #{tpu_custom_call.1} parent=1 // pred_fallthru
      _
    // Predicated region
    $region38: #{tpu_custom_call.1} parent=1 // pred_check
      _
    $region39: #{tpu_custom_call.1} parent=1 // pred_check_branch
      %441 = sbr.rel (0) target = $region41
    $region40: #{tpu_custom_call.1} parent=1 // pred_region
      %442 = dma.done [#allocation4], 1280
    $region41: #{tpu_custom_call.1} parent=1 // pred_fallthru
      _
    %443 = vsyncpa [#allocation3], 1
    %444 = vsyncpa [#allocation6], 1
    %445 = vsyncpa [#allocation4], 1

</llo_original>
